<compile_context>
chip_gen: v5e
topology: v5e:2x2
jax: 0.10.0
libtpu: 0.0.40
codegen_flags: <defaults>
</compile_context>

<pallas_src>
import functools

import jax
import jax.numpy as jnp
import numpy as np
from jax import lax
from jax.experimental import pallas as pl
from jax.experimental.pallas import tpu as pltpu


def _round_up(x, m):
    return (x + m - 1) // m * m


# ----------------------------- Pallas kernel ------------------------------- #

def _matmul_act_kernel(p_ref, w_ref, *out_refs, act):
    """out = act(P @ W); M/N tiled, reduction over the last grid axis (K)."""
    o_ref = out_refs[0]
    k = pl.program_id(2)

    @pl.when(k == 0)
    def _():
        o_ref[...] = jnp.zeros_like(o_ref)

    # bf16 x bf16 -> f32 accumulate directly into the resident output block.
    o_ref[...] += jnp.dot(p_ref[...], w_ref[...],
                          preferred_element_type=jnp.float32)

    @pl.when(k == pl.num_programs(2) - 1)
    def _():
        acc = o_ref[...]
        if act == "leaky":
            o_ref[...] = jnp.maximum(acc, 0.2 * acc)
        elif act == "sigmoid":
            # keep the linear conv5 in out_refs[0]; sigmoid goes to out_refs[1]
            out_refs[1][...] = 1.0 / (1.0 + jnp.exp(-acc))
        # act == "none": leave the accumulated value as-is.


def pallas_matmul_act(patches, w_mat, n_true, act):
    """patches: (M, K) bf16, w_mat: (K, Np) bf16 -> tuple of f32 (M, n_true).

    Returns (linear_or_activated,) for act in {"leaky", "none"} and
    (linear, sigmoid(linear)) for act == "sigmoid".
    """
    M, K = patches.shape
    K2, Np = w_mat.shape
    assert K == K2 and K % 128 == 0 and Np % 128 == 0

    # M tile: 256 for big problems, otherwise the (16-rounded) full extent.
    TM = 256 if M >= 256 else _round_up(M, 16)
    Mp = _round_up(M, TM)
    if Mp != M:
        patches = jnp.pad(patches, ((0, Mp - M), (0, 0)))

    TN = 256 if Np % 256 == 0 else 128
    kt = 512 if K % 512 == 0 else 128          # K is a multiple of 128
    grid = (Mp // TM, Np // TN, K // kt)

    n_out = 2 if act == "sigmoid" else 1
    out_shape = tuple(jax.ShapeDtypeStruct((Mp, Np), jnp.float32)
                      for _ in range(n_out))
    out_specs = tuple(pl.BlockSpec((TM, TN), lambda i, j, k: (i, j))
                      for _ in range(n_out))

    outs = pl.pallas_call(
        functools.partial(_matmul_act_kernel, act=act),
        out_shape=out_shape,
        grid_spec=pltpu.PrefetchScalarGridSpec(
            num_scalar_prefetch=0,
            grid=grid,
            in_specs=[
                pl.BlockSpec((TM, kt), lambda i, j, k: (i, k)),
                pl.BlockSpec((kt, TN), lambda i, j, k: (k, j)),
            ],
            out_specs=out_specs,
        ),
        compiler_params=pltpu.CompilerParams(
            dimension_semantics=("parallel", "parallel", "arbitrary"),
            vmem_limit_bytes=48 * 1024 * 1024,
        ),
    )(patches, w_mat)

    if not isinstance(outs, (tuple, list)):
        outs = (outs,)
    return tuple(o[:M, :n_true] for o in outs)


# ------------------------------ JAX glue ----------------------------------- #

def im2col(x_nhwc, k=4, stride=2, pad=1):
    """Extract 4x4 conv patches (bf16).  Returns ((N*OH*OW, k*k*C), (N,OH,OW))."""
    N, H, W, C = x_nhwc.shape
    xp = jnp.pad(x_nhwc.astype(jnp.bfloat16),
                 ((0, 0), (pad, pad), (pad, pad), (0, 0)))
    OH = (H + 2 * pad - k) // stride + 1
    OW = (W + 2 * pad - k) // stride + 1
    cols = []
    for i in range(k):
        for j in range(k):
            cols.append(
                xp[:, i:i + stride * OH:stride, j:j + stride * OW:stride, :])
    p = jnp.stack(cols, axis=3)                # (N, OH, OW, k*k, C)
    return p.reshape(N * OH * OW, k * k * C), (N, OH, OW)


def make_weights(in_channels, key):
    """Conv weights (Cout, Cin, 4, 4), normal(0, 0.02), spectral-normalized."""
    chans = [in_channels, 64, 128, 256, 512, 1]
    weights = []
    for li in range(5):
        key, sub = jax.random.split(key)
        cout, cin = chans[li + 1], chans[li]
        w = 0.02 * jax.random.normal(sub, (cout, cin, 4, 4), dtype=jnp.float32)
        # spectral_norm: divide by top singular value of weight.reshape(Cout,-1)
        sigma = jnp.linalg.svd(w.reshape(cout, -1), compute_uv=False)[0]
        weights.append(w / sigma)
    return weights


def prepare_weight_mats(conv_weights):
    """One-time weight prep: (Cout,Cin,4,4) -> padded bf16 (16*Cp, Np) matrix."""
    mats = []
    for w in conv_weights:
        cout, cin, kh, kw = w.shape
        cp = _round_up(cin, 8)                 # so K = 16*cp is a multiple of 128
        if cp != cin:
            w = jnp.pad(w, ((0, 0), (0, cp - cin), (0, 0), (0, 0)))
        # (Cout, Cp, KH, KW) -> (KH, KW, Cp, Cout) -> (KH*KW*Cp, Cout)
        w_mat = jnp.transpose(w, (2, 3, 1, 0)).reshape(kh * kw * cp, cout)
        np_ = _round_up(cout, 128)
        if np_ != cout:
            w_mat = jnp.pad(w_mat, ((0, 0), (0, np_ - cout)))
        mats.append((w_mat.astype(jnp.bfloat16), cout))
    return mats


def discriminator_forward(x_nchw, labelmap_nchw, w_mats, use_sigmoid=True):
    """Mirrors Discriminator.forward: returns (outputs, [conv1..conv5])."""
    if labelmap_nchw is not None:
        x_nchw = jnp.concatenate([x_nchw, labelmap_nchw], axis=1)
    h = jnp.transpose(x_nchw, (0, 2, 3, 1))    # NCHW -> NHWC (internal layout)

    strides = [2, 2, 2, 1, 1]
    feats = []
    sig_out = None
    for li, ((w_mat, cout), s) in enumerate(zip(w_mats, strides)):
        cp = w_mat.shape[0] // 16              # padded input-channel count
        if h.shape[-1] < cp:                   # only the first layer needs this
            h = jnp.pad(h, ((0, 0), (0, 0), (0, 0), (0, cp - h.shape[-1])))
        p, (N, OH, OW) = im2col(h, k=4, stride=s, pad=1)

        if li < 4:
            act = "leaky"
        else:
            act = "sigmoid" if use_sigmoid else "none"

        outs = pallas_matmul_act(p, w_mat, cout, act)
        lin = outs[0].reshape(N, OH, OW, cout)
        feats.append(lin)
        if act == "sigmoid":
            sig_out = outs[1].reshape(N, OH, OW, cout)
        h = lin

    conv5 = feats[-1]
    outputs = sig_out if use_sigmoid else conv5

    to_nchw = lambda t: jnp.transpose(t, (0, 3, 1, 2))
    return to_nchw(outputs), [to_nchw(f) for f in feats]


# Pure-JAX reference (lax conv, same bf16-in / f32-accumulate numerics) used
# to check the Pallas path.
def reference_forward(x_nchw, labelmap_nchw, conv_weights, use_sigmoid=True):
    x = jnp.concatenate([x_nchw, labelmap_nchw], axis=1)
    h = jnp.transpose(x, (0, 2, 3, 1))
    strides = [2, 2, 2, 1, 1]
    feats = []
    for li, (w, s) in enumerate(zip(conv_weights, strides)):
        k_hwio = jnp.transpose(w, (2, 3, 1, 0)).astype(jnp.bfloat16)
        h = lax.conv_general_dilated(
            h.astype(jnp.bfloat16), k_hwio, window_strides=(s, s),
            padding=[(1, 1), (1, 1)],
            dimension_numbers=("NHWC", "HWIO", "NHWC"),
            preferred_element_type=jnp.float32)
        if li < 4:
            h = jnp.maximum(h, 0.2 * h)
        feats.append(h)
    out = jax.nn.sigmoid(feats[-1]) if use_sigmoid else feats[-1]
    to_nchw = lambda t: jnp.transpose(t, (0, 3, 1, 2))
    return to_nchw(out), [to_nchw(f) for f in feats]


if __name__ == "__main__":
    key = jax.random.PRNGKey(0)
    k_x, k_lm, k_w = jax.random.split(key, 3)

    # small but valid shapes: 32x32 spatial so conv5 still has a >=1 output
    B, C_img, C_lab, H, W = 2, 3, 1, 32, 32
    x = jax.random.normal(k_x, (B, C_img, H, W), dtype=jnp.float32)
    labelmap = jax.random.normal(k_lm, (B, C_lab, H, W), dtype=jnp.float32)

    conv_weights = make_weights(C_img + C_lab, k_w)
    w_mats = prepare_weight_mats(conv_weights)   # one-time weight prep

    outputs, feats = discriminator_forward(x, labelmap, w_mats,
                                           use_sigmoid=True)
    outputs = jax.block_until_ready(outputs)
    feats = [jax.block_until_ready(f) for f in feats]

    # sanity check against plain-JAX reference conv (same bf16/f32 numerics)
    ref_out, ref_feats = reference_forward(x, labelmap, conv_weights,
                                           use_sigmoid=True)
    np.testing.assert_allclose(np.asarray(outputs), np.asarray(ref_out),
                               rtol=1e-2, atol=1e-2)
    for a, b in zip(feats, ref_feats):
        np.testing.assert_allclose(np.asarray(a), np.asarray(b),
                                   rtol=1e-2, atol=1e-2)

    assert outputs.shape == (B, 1, 2, 2)
    print("KERNEL_OK")
</pallas_src>

<mosaic_0001>
module attributes {stable_mosaic.version = 11 : i64} {
  func.func @_matmul_act_kernel(%arg0: i32, %arg1: i32, %arg2: i32, %arg3: memref<256x128xbf16, #tpu.memory_space<vmem>>, %arg4: memref<128x128xbf16, #tpu.memory_space<vmem>>, %arg5: memref<256x128xf32, #tpu.memory_space<vmem>>) attributes {dimension_semantics = [#tpu.dimension_semantics<parallel>, #tpu.dimension_semantics<parallel>, #tpu.dimension_semantics<arbitrary>], iteration_bounds = array<i64: 2, 1, 1>, scalar_prefetch = 0 : i64, scratch_operands = 0 : i64, tpu.core_type = #tpu.core_type<tc>, window_params = [{transform_indices = @transform_0, window_bounds = array<i64: 256, 128>}, {transform_indices = @transform_1, window_bounds = array<i64: 128, 128>}, {transform_indices = @transform_2, window_bounds = array<i64: 256, 128>}]} {
    %c0_i32 = arith.constant 0 : i32
    %0 = arith.cmpi eq, %arg2, %c0_i32 : i32
    %1 = arith.extui %0 : i1 to i32
    %c0_i32_0 = arith.constant 0 : i32
    %2 = arith.cmpi ne, %1, %c0_i32_0 : i32
    scf.if %2 {
      %cst_10 = arith.constant 0.000000e+00 : f32
      %12 = vector.broadcast %cst_10 : f32 to vector<256x128xf32>
      %c0_11 = arith.constant 0 : index
      %c0_12 = arith.constant 0 : index
      %13 = vector.load %arg5[%c0_11, %c0_12] : memref<256x128xf32, #tpu.memory_space<vmem>>, vector<256x128xf32>
      tpu.vector_store %arg5[%c0_11, %c0_12], %12 {strides = array<i32>} : memref<256x128xf32, #tpu.memory_space<vmem>>, vector<256x128xf32>,
    } else {
    }
    %c0 = arith.constant 0 : index
    %c0_1 = arith.constant 0 : index
    %3 = vector.load %arg5[%c0, %c0_1] : memref<256x128xf32, #tpu.memory_space<vmem>>, vector<256x128xf32>
    %c0_2 = arith.constant 0 : index
    %c0_3 = arith.constant 0 : index
    %4 = vector.load %arg3[%c0_2, %c0_3] : memref<256x128xbf16, #tpu.memory_space<vmem>>, vector<256x128xbf16>
    %c0_4 = arith.constant 0 : index
    %c0_5 = arith.constant 0 : index
    %5 = vector.load %arg4[%c0_4, %c0_5] : memref<128x128xbf16, #tpu.memory_space<vmem>>, vector<128x128xbf16>
    %cst = arith.constant dense<0.000000e+00> : vector<256x128xf32>
    %6 = tpu.matmul %4, %5, %cst {dimension_numbers = #tpu.dot_dimension_numbers<[1], [0], [0], [1], [0, 0, 1, 1], [], []>} : vector<256x128xbf16>, vector<128x128xbf16>, vector<256x128xf32> -> vector<256x128xf32>
    %7 = arith.addf %3, %6 : vector<256x128xf32>
    %c0_6 = arith.constant 0 : index
    %c0_7 = arith.constant 0 : index
    %8 = vector.load %arg5[%c0_6, %c0_7] : memref<256x128xf32, #tpu.memory_space<vmem>>, vector<256x128xf32>
    tpu.vector_store %arg5[%c0_6, %c0_7], %7 {strides = array<i32>} : memref<256x128xf32, #tpu.memory_space<vmem>>, vector<256x128xf32>,
    %c0_i32_8 = arith.constant 0 : i32
    %9 = arith.cmpi eq, %arg2, %c0_i32_8 : i32
    %10 = arith.extui %9 : i1 to i32
    %c0_i32_9 = arith.constant 0 : i32
    %11 = arith.cmpi ne, %10, %c0_i32_9 : i32
    scf.if %11 {
      %c0_10 = arith.constant 0 : index
      %c0_11 = arith.constant 0 : index
      %12 = vector.load %arg5[%c0_10, %c0_11] : memref<256x128xf32, #tpu.memory_space<vmem>>, vector<256x128xf32>
      %cst_12 = arith.constant 2.000000e-01 : f32
      %13 = vector.broadcast %cst_12 : f32 to vector<256x128xf32>
      %14 = arith.mulf %13, %12 : vector<256x128xf32>
      %15 = arith.maximumf %12, %14 : vector<256x128xf32>
      %c0_13 = arith.constant 0 : index
      %c0_14 = arith.constant 0 : index
      %16 = vector.load %arg5[%c0_13, %c0_14] : memref<256x128xf32, #tpu.memory_space<vmem>>, vector<256x128xf32>
      tpu.vector_store %arg5[%c0_13, %c0_14], %15 {strides = array<i32>} : memref<256x128xf32, #tpu.memory_space<vmem>>, vector<256x128xf32>,
    } else {
    }
    return
  }
  func.func @transform_0(%arg0: i32, %arg1: i32, %arg2: i32) -> (i32, i32) {
    %c0_i32 = arith.constant 0 : i32
    return %arg0, %arg2 : i32, i32
  }
  func.func @transform_1(%arg0: i32, %arg1: i32, %arg2: i32) -> (i32, i32) {
    %c0_i32 = arith.constant 0 : i32
    return %arg2, %arg1 : i32, i32
  }
  func.func @transform_2(%arg0: i32, %arg1: i32, %arg2: i32) -> (i32, i32) {
    %c0_i32 = arith.constant 0 : i32
    return %arg0, %arg1 : i32, i32
  }
}

</mosaic_0001>

<llo_original>
// kernel: tpu_custom_call.1
$region0: #{tpu_custom_call.1}
  #allocation0 [shape = 'u32[]', space=smem, size = 0x4, offset = 0x4, fixed_abs, tag = 'smem constant byte address 0x4 - core index']
  #allocation1 [shape = 'u32[72,128]{1,0:T(1,128)}', space=vmem, size = 0x9000, scoped, tag = 'internal scratch']
  %s0 = inlined_call_operand.hbm [shape: bf16[512,128], index: 0, kind: input, shape index: {}]
  %s1 = inlined_call_operand.hbm [shape: bf16[128,128], index: 1, kind: input, shape index: {}]
  %s2 = inlined_call_operand.hbm [shape: f32[512,128], index: 2, kind: output, shape index: {}]
  %s3 = sld [smem:[#allocation0]]
  $region57: #{tpu_custom_call.1} parent=0
    _
  %s5 = ssub.s32 1, %s3
  %s6 = scalar_select 0, %s5, %s3
  $region1: #{tpu_custom_call.1} parent=0
    #allocation2 [shape = 'u8[131072]{0}', space=vmem, size = 0x20000, scoped, tag = 'input window, operand 0']
    #allocation3 [shape = 's32[2]{0}', space=sflag, size = 0x8, scoped, tag = 'scoped memory for tpu_custom_call.1']
    #allocation4 [shape = 's32[2]{0}', space=sflag, size = 0x8, scoped, tag = 'scoped memory for tpu_custom_call.1']
    #allocation5 [shape = 'u8[32768]{0}', space=vmem, size = 0x8000, scoped, tag = 'input window, operand 1, single buffered']
    #allocation6 [shape = 's32[1]{0}', space=sflag, size = 0x4, scoped, tag = 'scoped memory for tpu_custom_call.1']
    #allocation7 [shape = 'u8[262144]{0}', space=vmem, size = 0x40000, scoped, tag = 'output window, operand 0']
    %7 = vsyncpa [#allocation3], 0
    %s8 = scalar_lea.sflag [#allocation3], 1
    %9 = vsyncpa %s8, 0
    %10 = vsyncpa [#allocation6], 0
    %11 = vsyncpa [#allocation4], 0
    %s12 = scalar_lea.sflag [#allocation4], 1
    %13 = vsyncpa %s12, 0
    loop: start=0, step=1, limit=4
    $region2: #{tpu_custom_call.1} parent=1 // loop_pre_header
      _
    $region3: #{tpu_custom_call.1} parent=1 // loop_header
      %s15 = sphi 0, %s19
      %p16 = scmp.ge.s32.totalorder %s15, 4
      %s22 = sphi 0, %s41
      %s23 = sphi 0, %s37
      %s24 = sphi 0, %s33
      %s25 = sphi 0, %s22
      %s26 = sphi 0, %s23
      %s27 = sphi 0, %s24
      %s28 = sphi 0, %s25
      %s29 = sphi 0, %s26
      %s30 = sphi 0, %s27
      %s46 = sphi 0, %s48
      %s49 = sphi 0, %s46
      %s50 = sphi 0, %s49
      %s66 = sphi 0, %s50
      %s74 = sphi 0, %s76
      %s77 = sphi 0, %s74
      %s78 = sphi 0, %s77
      %s94 = sphi 0, %s78
      %s102 = sphi 0, %s104
      %s105 = sphi 0, %s102
      %s106 = sphi 0, %s105
      %s122 = sphi 0, %s106
    $region4: #{tpu_custom_call.1} parent=1 // loop_header_branch
      %18 = sbr.rel (%p16) target = $region8
    $region5: #{tpu_custom_call.1} parent=1 // loop_body
      %s20 = ssub.s32 %s15, 1
      %s21 = ssub.s32 %s15, 2
      %s31 = sadd.s32 1, %s24
      %p32 = scmp.ge.s32.totalorder %s31, 1
      %s33 = scalar_select %p32, 0, %s31
      %s34 = sadd.s32 1, %s23
      %s35 = scalar_select %p32, %s34, %s23
      %p36 = scmp.ge.s32.totalorder %s35, 1
      %s37 = scalar_select %p36, 0, %s35
      %s38 = sadd.s32 1, %s22
      %s39 = scalar_select %p36, %s38, %s22
      %p40 = scmp.ge.s32.totalorder %s39, 2
      %s41 = scalar_select %p40, 0, %s39
      %s42 = ssub.s32 %s22, %s41
      %s43 = ssub.s32 %s24, %s33
      %s44 = sor.u32 %s42, %s43
      %p45 = scmp.eq.s32.totalorder %s44, 0
      %s47 = sadd.s32 %s46, 1
      %s48 = scalar_select %p45, %s46, %s47
      %p51 = pneg %p45
      %p52 = scmp.eq.s32.totalorder %s15, 1
      %p53 = por %p51, %p52
      %p54 = scmp.ne.s32.totalorder %s46, %s49
      %p55 = scmp.eq.s32.totalorder %s15, 0
      %p56 = por %p54, %p55
      %p57 = scmp.ne.s32.totalorder %s46, %s49
      %p58 = scmp.eq.s32.totalorder %s20, 1
      %p59 = por %p57, %p58
      %p60 = scmp.ne.s32.totalorder %s49, %s50
      %p61 = scmp.eq.s32.totalorder %s20, 0
      %p62 = por %p60, %p61
      %p63 = scmp.ne.s32.totalorder %s49, %s50
      %p64 = scmp.eq.s32.totalorder %s21, 1
      %p65 = por %p63, %p64
      %p67 = scmp.ne.s32.totalorder %s50, %s66
      %p68 = scmp.eq.s32.totalorder %s21, 0
      %p69 = por %p67, %p68
      %s70 = ssub.s32 %s24, %s33
      %s71 = ssub.s32 %s23, %s37
      %s72 = sor.u32 %s70, %s71
      %p73 = scmp.eq.s32.totalorder %s72, 0
      %s75 = sadd.s32 %s74, 1
      %s76 = scalar_select %p73, %s74, %s75
      %p79 = pneg %p73
      %p80 = scmp.eq.s32.totalorder %s15, 1
      %p81 = por %p79, %p80
      %p82 = scmp.ne.s32.totalorder %s74, %s77
      %p83 = scmp.eq.s32.totalorder %s15, 0
      %p84 = por %p82, %p83
      %p85 = scmp.ne.s32.totalorder %s74, %s77
      %p86 = scmp.eq.s32.totalorder %s20, 1
      %p87 = por %p85, %p86
      %p88 = scmp.ne.s32.totalorder %s77, %s78
      %p89 = scmp.eq.s32.totalorder %s20, 0
      %p90 = por %p88, %p89
      %p91 = scmp.ne.s32.totalorder %s77, %s78
      %p92 = scmp.eq.s32.totalorder %s21, 1
      %p93 = por %p91, %p92
      %p95 = scmp.ne.s32.totalorder %s78, %s94
      %p96 = scmp.eq.s32.totalorder %s21, 0
      %p97 = por %p95, %p96
      %s98 = ssub.s32 %s22, %s41
      %s99 = ssub.s32 %s23, %s37
      %s100 = sor.u32 %s98, %s99
      %p101 = scmp.eq.s32.totalorder %s100, 0
      %s103 = sadd.s32 %s102, 1
      %s104 = scalar_select %p101, %s102, %s103
      %p107 = pneg %p101
      %p108 = scmp.eq.s32.totalorder %s15, 1
      %p109 = por %p107, %p108
      %p110 = scmp.ne.s32.totalorder %s102, %s105
      %p111 = scmp.eq.s32.totalorder %s15, 0
      %p112 = por %p110, %p111
      %p113 = scmp.ne.s32.totalorder %s102, %s105
      %p114 = scmp.eq.s32.totalorder %s20, 1
      %p115 = por %p113, %p114
      %p116 = scmp.ne.s32.totalorder %s105, %s106
      %p117 = scmp.eq.s32.totalorder %s20, 0
      %p118 = por %p116, %p117
      %p119 = scmp.ne.s32.totalorder %s105, %s106
      %p120 = scmp.eq.s32.totalorder %s21, 1
      %p121 = por %p119, %p120
      %p123 = scmp.ne.s32.totalorder %s106, %s122
      %p124 = scmp.eq.s32.totalorder %s21, 0
      %p125 = por %p123, %p124
      %p126 = scmp.le.s32.totalorder 1, %s15
      %p127 = scmp.lt.s32.totalorder %s15, 3
      %p128 = pnand %p126, %p127
      %p129 = pneg %p128
      // Predicated region
      $region9: #{tpu_custom_call.1} parent=5 // pred_check
        _
      $region10: #{tpu_custom_call.1} parent=5 // pred_check_branch
        %131 = sbr.rel (%p128) target = $region12
      $region11: #{tpu_custom_call.1} parent=5 // pred_region
        %s132 = ssub.s32 %s15, 1
        // Predicated region
        $region13: #{tpu_custom_call.1} parent=11 // pred_check
          %p133 = pneg %p90
        $region14: #{tpu_custom_call.1} parent=11 // pred_check_branch
          %135 = sbr.rel (%p133) target = $region16
        $region15: #{tpu_custom_call.1} parent=11 // pred_region
          %s136 = smul.u32 16, %s27
          %138 = vsyncadd [#allocation6], 0
          %s139 = sadd.s32 %s26, %s136
          %s140 = smul.addr %s139, 4
          %s141 = scalar_lea.hbm %s1, %s140
          %s142 = sshll.u32 %s141, 4
          %s143 = int_to_ptr.hbm [resolvable:$true] %s142
          %s144 = sshll.u32 [#allocation5], 4
          %s145 = int_to_ptr.vmem [resolvable:$true] %s144
          %150 = dma.hbm_to_vmem [thread:$0]  %s143, 1024, %s145, [#allocation6], 64, 64, 4
        $region16: #{tpu_custom_call.1} parent=11 // pred_fallthru
          _
      $region12: #{tpu_custom_call.1} parent=5 // pred_fallthru
        _
      %p151 = scmp.lt.s32.totalorder %s15, 2
      // Predicated region
      $region17: #{tpu_custom_call.1} parent=5 // pred_check
        %p152 = pneg %p151
      $region18: #{tpu_custom_call.1} parent=5 // pred_check_branch
        %154 = sbr.rel (%p152) target = $region20
      $region19: #{tpu_custom_call.1} parent=5 // pred_region
        // Predicated region
        $region21: #{tpu_custom_call.1} parent=19 // pred_check
          %p155 = pneg %p56
        $region22: #{tpu_custom_call.1} parent=19 // pred_check_branch
          %157 = sbr.rel (%p155) target = $region24
        $region23: #{tpu_custom_call.1} parent=19 // pred_region
          %s158 = sand.u32 %s46, 1
          %s159 = scalar_lea.sflag [#allocation3], %s158
          %s160 = sand.u32 %s46, 1
          %s161 = smul.addr %s160, 128
          %s162 = scalar_lea.vmem [#allocation2], %s161
          %s163 = smul.u32 32, %s22
          %165 = vsyncadd %s159, 0
          %s166 = sadd.s32 %s24, %s163
          %s167 = smul.addr %s166, 4
          %s168 = scalar_lea.hbm %s0, %s167
          %s169 = sshll.u32 %s168, 4
          %s170 = int_to_ptr.hbm [resolvable:$true] %s169
          %s171 = sshll.u32 %s162, 4
          %s172 = int_to_ptr.vmem [resolvable:$true] %s171
          %177 = dma.hbm_to_vmem [thread:$0]  %s170, 2048, %s172, %s159, 64, 64, 4
        $region24: #{tpu_custom_call.1} parent=19 // pred_fallthru
          _
      $region20: #{tpu_custom_call.1} parent=5 // pred_fallthru
        _
      %p178 = scmp.le.s32.totalorder 1, %s15
      %p179 = scmp.lt.s32.totalorder %s15, 3
      %p180 = pnand %p178, %p179
      %p181 = pneg %p180
      // Predicated region
      $region25: #{tpu_custom_call.1} parent=5 // pred_check
        _
      $region26: #{tpu_custom_call.1} parent=5 // pred_check_branch
        %183 = sbr.rel (%p180) target = $region28
      $region27: #{tpu_custom_call.1} parent=5 // pred_region
        %s184 = ssub.s32 %s15, 1
        %s185 = sand.u32 %s49, 1
        %s186 = scalar_lea.sflag [#allocation3], %s185
        %s187 = sand.u32 %s49, 1
        %s188 = smul.addr %s187, 128
        %s189 = scalar_lea.vmem [#allocation2], %s188
        // Predicated region
        $region29: #{tpu_custom_call.1} parent=27 // pred_check
          %p190 = pneg %p62
        $region30: #{tpu_custom_call.1} parent=27 // pred_check_branch
          %192 = sbr.rel (%p190) target = $region32
        $region31: #{tpu_custom_call.1} parent=27 // pred_region
          %194 = dma.done %s186, 2048
        $region32: #{tpu_custom_call.1} parent=27 // pred_fallthru
          _
        // Predicated region
        $region33: #{tpu_custom_call.1} parent=27 // pred_check
          %p195 = pneg %p90
        $region34: #{tpu_custom_call.1} parent=27 // pred_check_branch
          %197 = sbr.rel (%p195) target = $region36
        $region35: #{tpu_custom_call.1} parent=27 // pred_region
          %199 = dma.done [#allocation6], 1024
        $region36: #{tpu_custom_call.1} parent=27 // pred_fallthru
          _
        %s200 = sand.u32 %s49, 1
        %s201 = scalar_lea.sflag [#allocation3], %s200
        %s202 = sand.u32 %s49, 1
        %s203 = smul.addr %s202, 128
        %s204 = scalar_lea.vmem [#allocation2], %s203
        %p205 = pneg %p62
        %p206 = pneg %p59
        %p207 = pneg %p90
        %p208 = pneg %p87
        %p209 = pneg %p118
        %p210 = pneg %p115
        %s211 = sand.u32 %s105, 1
        %s212 = scalar_lea.sflag [#allocation4], %s211
        %s213 = sand.u32 %s105, 1
        %s214 = smul.addr %s213, 256
        %s215 = scalar_lea.vmem [#allocation7], %s214
        %s216 = smul.u32 32, %s25
        %s217 = smul.u32 16, %s27
        %s218 = smul.u32 32, %s25
        %p219 = scmp.eq.s32.totalorder %s27, 0
        // Predicated region
        $region37: #{tpu_custom_call.1} parent=27 // pred_check
          %p220 = pneg %p219
        $region38: #{tpu_custom_call.1} parent=27 // pred_check_branch
          %222 = sbr.rel (%p220) target = $region40
        $region39: #{tpu_custom_call.1} parent=27 // pred_region
          %223 = vst [vmem:[%s215] sm:$0xff] 0.0
          %224 = vst [vmem:[%s215 + $0x8] sm:$0xff] 0.0
          %225 = vst [vmem:[%s215 + $0x10] sm:$0xff] 0.0
          %226 = vst [vmem:[%s215 + $0x18] sm:$0xff] 0.0
          %227 = vst [vmem:[%s215 + $0x20] sm:$0xff] 0.0
          %228 = vst [vmem:[%s215 + $0x28] sm:$0xff] 0.0
          %229 = vst [vmem:[%s215 + $0x30] sm:$0xff] 0.0
          %230 = vst [vmem:[%s215 + $0x38] sm:$0xff] 0.0
          %231 = vst [vmem:[%s215 + $0x40] sm:$0xff] 0.0
          %232 = vst [vmem:[%s215 + $0x48] sm:$0xff] 0.0
          %233 = vst [vmem:[%s215 + $0x50] sm:$0xff] 0.0
          %234 = vst [vmem:[%s215 + $0x58] sm:$0xff] 0.0
          %235 = vst [vmem:[%s215 + $0x60] sm:$0xff] 0.0
          %236 = vst [vmem:[%s215 + $0x68] sm:$0xff] 0.0
          %237 = vst [vmem:[%s215 + $0x70] sm:$0xff] 0.0
          %238 = vst [vmem:[%s215 + $0x78] sm:$0xff] 0.0
          %239 = vst [vmem:[%s215 + $0x80] sm:$0xff] 0.0
          %240 = vst [vmem:[%s215 + $0x88] sm:$0xff] 0.0
          %241 = vst [vmem:[%s215 + $0x90] sm:$0xff] 0.0
          %242 = vst [vmem:[%s215 + $0x98] sm:$0xff] 0.0
          %243 = vst [vmem:[%s215 + $0xa0] sm:$0xff] 0.0
          %244 = vst [vmem:[%s215 + $0xa8] sm:$0xff] 0.0
          %245 = vst [vmem:[%s215 + $0xb0] sm:$0xff] 0.0
          %246 = vst [vmem:[%s215 + $0xb8] sm:$0xff] 0.0
          %247 = vst [vmem:[%s215 + $0xc0] sm:$0xff] 0.0
          %248 = vst [vmem:[%s215 + $0xc8] sm:$0xff] 0.0
          %249 = vst [vmem:[%s215 + $0xd0] sm:$0xff] 0.0
          %250 = vst [vmem:[%s215 + $0xd8] sm:$0xff] 0.0
          %251 = vst [vmem:[%s215 + $0xe0] sm:$0xff] 0.0
          %252 = vst [vmem:[%s215 + $0xe8] sm:$0xff] 0.0
          %253 = vst [vmem:[%s215 + $0xf0] sm:$0xff] 0.0
          %254 = vst [vmem:[%s215 + $0xf8] sm:$0xff] 0.0
        $region40: #{tpu_custom_call.1} parent=27 // pred_fallthru
          _
        %v255 = vld [vmem:[%s215] sm:$0xff]
        %v256 = vld [vmem:[%s215 + $0x8] sm:$0xff]
        %v257 = vld [vmem:[%s215 + $0x10] sm:$0xff]
        %v258 = vld [vmem:[%s215 + $0x18] sm:$0xff]
        %v259 = vld [vmem:[%s215 + $0x20] sm:$0xff]
        %v260 = vld [vmem:[%s215 + $0x28] sm:$0xff]
        %v261 = vld [vmem:[%s215 + $0x30] sm:$0xff]
        %v262 = vld [vmem:[%s215 + $0x38] sm:$0xff]
        %v263 = vld [vmem:[%s215 + $0x40] sm:$0xff]
        %v264 = vld [vmem:[%s215 + $0x48] sm:$0xff]
        %v265 = vld [vmem:[%s215 + $0x50] sm:$0xff]
        %v266 = vld [vmem:[%s215 + $0x58] sm:$0xff]
        %v267 = vld [vmem:[%s215 + $0x60] sm:$0xff]
        %v268 = vld [vmem:[%s215 + $0x68] sm:$0xff]
        %v269 = vld [vmem:[%s215 + $0x70] sm:$0xff]
        %v270 = vld [vmem:[%s215 + $0x78] sm:$0xff]
        %v271 = vld [vmem:[%s215 + $0x80] sm:$0xff]
        %v272 = vld [vmem:[%s215 + $0x88] sm:$0xff]
        %v273 = vld [vmem:[%s215 + $0x90] sm:$0xff]
        %v274 = vld [vmem:[%s215 + $0x98] sm:$0xff]
        %v275 = vld [vmem:[%s215 + $0xa0] sm:$0xff]
        %v276 = vld [vmem:[%s215 + $0xa8] sm:$0xff]
        %v277 = vld [vmem:[%s215 + $0xb0] sm:$0xff]
        %v278 = vld [vmem:[%s215 + $0xb8] sm:$0xff]
        %v279 = vld [vmem:[%s215 + $0xc0] sm:$0xff]
        %v280 = vld [vmem:[%s215 + $0xc8] sm:$0xff]
        %v281 = vld [vmem:[%s215 + $0xd0] sm:$0xff]
        %v282 = vld [vmem:[%s215 + $0xd8] sm:$0xff]
        %v283 = vld [vmem:[%s215 + $0xe0] sm:$0xff]
        %v284 = vld [vmem:[%s215 + $0xe8] sm:$0xff]
        %v285 = vld [vmem:[%s215 + $0xf0] sm:$0xff]
        %v286 = vld [vmem:[%s215 + $0xf8] sm:$0xff]
        %v287 = vld [vmem:[%s189] sm:$0xf]
        %v288 = vld [vmem:[%s189 + $0x4] sm:$0xf]
        %v289 = vld [vmem:[%s189 + $0x8] sm:$0xf]
        %v290 = vld [vmem:[%s189 + $0xc] sm:$0xf]
        %v291 = vld [vmem:[%s189 + $0x10] sm:$0xf]
        %v292 = vld [vmem:[%s189 + $0x14] sm:$0xf]
        %v293 = vld [vmem:[%s189 + $0x18] sm:$0xf]
        %v294 = vld [vmem:[%s189 + $0x1c] sm:$0xf]
        %v295 = vld [vmem:[%s189 + $0x20] sm:$0xf]
        %v296 = vld [vmem:[%s189 + $0x24] sm:$0xf]
        %v297 = vld [vmem:[%s189 + $0x28] sm:$0xf]
        %v298 = vld [vmem:[%s189 + $0x2c] sm:$0xf]
        %v299 = vld [vmem:[%s189 + $0x30] sm:$0xf]
        %v300 = vld [vmem:[%s189 + $0x34] sm:$0xf]
        %v301 = vld [vmem:[%s189 + $0x38] sm:$0xf]
        %v302 = vld [vmem:[%s189 + $0x3c] sm:$0xf]
        %v303 = vld [vmem:[%s189 + $0x40] sm:$0xf]
        %v304 = vld [vmem:[%s189 + $0x44] sm:$0xf]
        %v305 = vld [vmem:[%s189 + $0x48] sm:$0xf]
        %v306 = vld [vmem:[%s189 + $0x4c] sm:$0xf]
        %v307 = vld [vmem:[%s189 + $0x50] sm:$0xf]
        %v308 = vld [vmem:[%s189 + $0x54] sm:$0xf]
        %v309 = vld [vmem:[%s189 + $0x58] sm:$0xf]
        %v310 = vld [vmem:[%s189 + $0x5c] sm:$0xf]
        %v311 = vld [vmem:[%s189 + $0x60] sm:$0xf]
        %v312 = vld [vmem:[%s189 + $0x64] sm:$0xf]
        %v313 = vld [vmem:[%s189 + $0x68] sm:$0xf]
        %v314 = vld [vmem:[%s189 + $0x6c] sm:$0xf]
        %v315 = vld [vmem:[%s189 + $0x70] sm:$0xf]
        %v316 = vld [vmem:[%s189 + $0x74] sm:$0xf]
        %v317 = vld [vmem:[%s189 + $0x78] sm:$0xf]
        %v318 = vld [vmem:[%s189 + $0x7c] sm:$0xf]
        %v319 = vld [vmem:[#allocation5] sm:$0xf]
        %v320 = vld [vmem:[#allocation5 + $0x4] sm:$0xf]
        %v321 = vld [vmem:[#allocation5 + $0x8] sm:$0xf]
        %v322 = vld [vmem:[#allocation5 + $0xc] sm:$0xf]
        %v323 = vld [vmem:[#allocation5 + $0x10] sm:$0xf]
        %v324 = vld [vmem:[#allocation5 + $0x14] sm:$0xf]
        %v325 = vld [vmem:[#allocation5 + $0x18] sm:$0xf]
        %v326 = vld [vmem:[#allocation5 + $0x1c] sm:$0xf]
        %v327 = vld [vmem:[#allocation5 + $0x20] sm:$0xf]
        %v328 = vld [vmem:[#allocation5 + $0x24] sm:$0xf]
        %v329 = vld [vmem:[#allocation5 + $0x28] sm:$0xf]
        %v330 = vld [vmem:[#allocation5 + $0x2c] sm:$0xf]
        %v331 = vld [vmem:[#allocation5 + $0x30] sm:$0xf]
        %v332 = vld [vmem:[#allocation5 + $0x34] sm:$0xf]
        %v333 = vld [vmem:[#allocation5 + $0x38] sm:$0xf]
        %v334 = vld [vmem:[#allocation5 + $0x3c] sm:$0xf]
        %v367 = vunpack.c.l.b16 %v287
        %v368 = vunpack.c.l.b16 %v288
        %v369 = vunpack.c.l.b16 %v289
        %v370 = vunpack.c.l.b16 %v290
        %v371 = vunpack.c.l.b16 %v291
        %v372 = vunpack.c.l.b16 %v292
        %v373 = vunpack.c.l.b16 %v293
        %v374 = vunpack.c.l.b16 %v294
        %v375 = vunpack.c.l.b16 %v295
        %v376 = vunpack.c.l.b16 %v296
        %v377 = vunpack.c.l.b16 %v297
        %v378 = vunpack.c.l.b16 %v298
        %v379 = vunpack.c.l.b16 %v299
        %v380 = vunpack.c.l.b16 %v300
        %v381 = vunpack.c.l.b16 %v301
        %v382 = vunpack.c.l.b16 %v302
        %v383 = vunpack.c.l.b16 %v303
        %v384 = vunpack.c.l.b16 %v304
        %v385 = vunpack.c.l.b16 %v305
        %v386 = vunpack.c.l.b16 %v306
        %v387 = vunpack.c.l.b16 %v307
        %v388 = vunpack.c.l.b16 %v308
        %v389 = vunpack.c.l.b16 %v309
        %v390 = vunpack.c.l.b16 %v310
        %v391 = vunpack.c.l.b16 %v311
        %v392 = vunpack.c.l.b16 %v312
        %v393 = vunpack.c.l.b16 %v313
        %v394 = vunpack.c.l.b16 %v314
        %v395 = vunpack.c.l.b16 %v315
        %v396 = vunpack.c.l.b16 %v316
        %v397 = vunpack.c.l.b16 %v317
        %v398 = vunpack.c.l.b16 %v318
        %v399 = vpack.c.b16 %v368, %v367
        %v400 = vpack.c.b16 %v370, %v369
        %v401 = vpack.c.b16 %v372, %v371
        %v402 = vpack.c.b16 %v374, %v373
        %v403 = vpack.c.b16 %v376, %v375
        %v404 = vpack.c.b16 %v378, %v377
        %v405 = vpack.c.b16 %v380, %v379
        %v406 = vpack.c.b16 %v382, %v381
        %v407 = vpack.c.b16 %v384, %v383
        %v408 = vpack.c.b16 %v386, %v385
        %v409 = vpack.c.b16 %v388, %v387
        %v410 = vpack.c.b16 %v390, %v389
        %v411 = vpack.c.b16 %v392, %v391
        %v412 = vpack.c.b16 %v394, %v393
        %v413 = vpack.c.b16 %v396, %v395
        %v414 = vpack.c.b16 %v398, %v397
        %v447 = vunpack.c.l.b16 %v319
        %v448 = vunpack.c.l.b16 %v320
        %v449 = vunpack.c.l.b16 %v321
        %v450 = vunpack.c.l.b16 %v322
        %v451 = vunpack.c.l.b16 %v323
        %v452 = vunpack.c.l.b16 %v324
        %v453 = vunpack.c.l.b16 %v325
        %v454 = vunpack.c.l.b16 %v326
        %v455 = vunpack.c.l.b16 %v327
        %v456 = vunpack.c.l.b16 %v328
        %v457 = vunpack.c.l.b16 %v329
        %v458 = vunpack.c.l.b16 %v330
        %v459 = vunpack.c.l.b16 %v331
        %v460 = vunpack.c.l.b16 %v332
        %v461 = vunpack.c.l.b16 %v333
        %v462 = vunpack.c.l.b16 %v334
        %v463 = vpack.c.b16 %v448, %v447
        %v464 = vpack.c.b16 %v450, %v449
        %v465 = vpack.c.b16 %v452, %v451
        %v466 = vpack.c.b16 %v454, %v453
        %v467 = vpack.c.b16 %v456, %v455
        %v468 = vpack.c.b16 %v458, %v457
        %v469 = vpack.c.b16 %v460, %v459
        %v470 = vpack.c.b16 %v462, %v461
        %479 = vmatpush.bf16.msra.mxu0 %v470
        %480 = vmatpush.bf16.msra.mxu0 %v469
        %481 = vmatpush.bf16.msra.mxu0 %v468
        %482 = vmatpush.bf16.msra.mxu0 %v467
        %483 = vmatpush.bf16.msra.mxu0 %v466
        %484 = vmatpush.bf16.msra.mxu0 %v465
        %485 = vmatpush.bf16.msra.mxu0 %v464
        %486 = vmatpush.bf16.msra.mxu0 %v463
        %487 = vmatmul.bf16.gmra.mxu0 %v399
        %v488 = vpop.f32.mrf.mxu0
        %v489 = vadd.f32 0.0, %v488
        %v490 = vpop.f32.mrf.mxu0
        %v491 = vadd.f32 0.0, %v490
        %492 = vmatmul.bf16.gmra.mxu0 %v400
        %v493 = vpop.f32.mrf.mxu0
        %v494 = vadd.f32 0.0, %v493
        %v495 = vpop.f32.mrf.mxu0
        %v496 = vadd.f32 0.0, %v495
        %497 = vmatmul.bf16.gmra.mxu0 %v401
        %v498 = vpop.f32.mrf.mxu0
        %v499 = vadd.f32 0.0, %v498
        %v500 = vpop.f32.mrf.mxu0
        %v501 = vadd.f32 0.0, %v500
        %502 = vmatmul.bf16.gmra.mxu0 %v402
        %v503 = vpop.f32.mrf.mxu0
        %v504 = vadd.f32 0.0, %v503
        %v505 = vpop.f32.mrf.mxu0
        %v506 = vadd.f32 0.0, %v505
        %507 = vmatmul.bf16.gmra.mxu0 %v403
        %v508 = vpop.f32.mrf.mxu0
        %v509 = vadd.f32 0.0, %v508
        %v510 = vpop.f32.mrf.mxu0
        %v511 = vadd.f32 0.0, %v510
        %512 = vmatmul.bf16.gmra.mxu0 %v404
        %v513 = vpop.f32.mrf.mxu0
        %v514 = vadd.f32 0.0, %v513
        %v515 = vpop.f32.mrf.mxu0
        %v516 = vadd.f32 0.0, %v515
        %517 = vmatmul.bf16.gmra.mxu0 %v405
        %v518 = vpop.f32.mrf.mxu0
        %v519 = vadd.f32 0.0, %v518
        %v520 = vpop.f32.mrf.mxu0
        %v521 = vadd.f32 0.0, %v520
        %522 = vmatmul.bf16.gmra.mxu0 %v406
        %v523 = vpop.f32.mrf.mxu0
        %v524 = vadd.f32 0.0, %v523
        %v525 = vpop.f32.mrf.mxu0
        %v526 = vadd.f32 0.0, %v525
        %527 = vmatmul.bf16.gmra.mxu0 %v407
        %v528 = vpop.f32.mrf.mxu0
        %v529 = vadd.f32 0.0, %v528
        %v530 = vpop.f32.mrf.mxu0
        %v531 = vadd.f32 0.0, %v530
        %532 = vmatmul.bf16.gmra.mxu0 %v408
        %v533 = vpop.f32.mrf.mxu0
        %v534 = vadd.f32 0.0, %v533
        %v535 = vpop.f32.mrf.mxu0
        %v536 = vadd.f32 0.0, %v535
        %537 = vmatmul.bf16.gmra.mxu0 %v409
        %v538 = vpop.f32.mrf.mxu0
        %v539 = vadd.f32 0.0, %v538
        %v540 = vpop.f32.mrf.mxu0
        %v541 = vadd.f32 0.0, %v540
        %542 = vmatmul.bf16.gmra.mxu0 %v410
        %v543 = vpop.f32.mrf.mxu0
        %v544 = vadd.f32 0.0, %v543
        %v545 = vpop.f32.mrf.mxu0
        %v546 = vadd.f32 0.0, %v545
        %547 = vmatmul.bf16.gmra.mxu0 %v411
        %v548 = vpop.f32.mrf.mxu0
        %v549 = vadd.f32 0.0, %v548
        %v550 = vpop.f32.mrf.mxu0
        %v551 = vadd.f32 0.0, %v550
        %552 = vmatmul.bf16.gmra.mxu0 %v412
        %v553 = vpop.f32.mrf.mxu0
        %v554 = vadd.f32 0.0, %v553
        %v555 = vpop.f32.mrf.mxu0
        %v556 = vadd.f32 0.0, %v555
        %557 = vmatmul.bf16.gmra.mxu0 %v413
        %v558 = vpop.f32.mrf.mxu0
        %v559 = vadd.f32 0.0, %v558
        %v560 = vpop.f32.mrf.mxu0
        %v561 = vadd.f32 0.0, %v560
        %562 = vmatmul.bf16.gmra.mxu0 %v414
        %v563 = vpop.f32.mrf.mxu0
        %v564 = vadd.f32 0.0, %v563
        %v565 = vpop.f32.mrf.mxu0
        %v566 = vadd.f32 0.0, %v565
        %567 = vdwg.mxu0
        %v568 = vadd.f32 %v255, %v489
        %v569 = vadd.f32 %v256, %v491
        %v570 = vadd.f32 %v257, %v494
        %v571 = vadd.f32 %v258, %v496
        %v572 = vadd.f32 %v259, %v499
        %v573 = vadd.f32 %v260, %v501
        %v574 = vadd.f32 %v261, %v504
        %v575 = vadd.f32 %v262, %v506
        %v576 = vadd.f32 %v263, %v509
        %v577 = vadd.f32 %v264, %v511
        %v578 = vadd.f32 %v265, %v514
        %v579 = vadd.f32 %v266, %v516
        %v580 = vadd.f32 %v267, %v519
        %v581 = vadd.f32 %v268, %v521
        %v582 = vadd.f32 %v269, %v524
        %v583 = vadd.f32 %v270, %v526
        %v584 = vadd.f32 %v271, %v529
        %v585 = vadd.f32 %v272, %v531
        %v586 = vadd.f32 %v273, %v534
        %v587 = vadd.f32 %v274, %v536
        %v588 = vadd.f32 %v275, %v539
        %v589 = vadd.f32 %v276, %v541
        %v590 = vadd.f32 %v277, %v544
        %v591 = vadd.f32 %v278, %v546
        %v592 = vadd.f32 %v279, %v549
        %v593 = vadd.f32 %v280, %v551
        %v594 = vadd.f32 %v281, %v554
        %v595 = vadd.f32 %v282, %v556
        %v596 = vadd.f32 %v283, %v559
        %v597 = vadd.f32 %v284, %v561
        %v598 = vadd.f32 %v285, %v564
        %v599 = vadd.f32 %v286, %v566
        %600 = vst [vmem:[%s215] sm:$0xff] %v568
        %601 = vst [vmem:[%s215 + $0x8] sm:$0xff] %v569
        %602 = vst [vmem:[%s215 + $0x10] sm:$0xff] %v570
        %603 = vst [vmem:[%s215 + $0x18] sm:$0xff] %v571
        %604 = vst [vmem:[%s215 + $0x20] sm:$0xff] %v572
        %605 = vst [vmem:[%s215 + $0x28] sm:$0xff] %v573
        %606 = vst [vmem:[%s215 + $0x30] sm:$0xff] %v574
        %607 = vst [vmem:[%s215 + $0x38] sm:$0xff] %v575
        %608 = vst [vmem:[%s215 + $0x40] sm:$0xff] %v576
        %609 = vst [vmem:[%s215 + $0x48] sm:$0xff] %v577
        %610 = vst [vmem:[%s215 + $0x50] sm:$0xff] %v578
        %611 = vst [vmem:[%s215 + $0x58] sm:$0xff] %v579
        %612 = vst [vmem:[%s215 + $0x60] sm:$0xff] %v580
        %613 = vst [vmem:[%s215 + $0x68] sm:$0xff] %v581
        %614 = vst [vmem:[%s215 + $0x70] sm:$0xff] %v582
        %615 = vst [vmem:[%s215 + $0x78] sm:$0xff] %v583
        %616 = vst [vmem:[%s215 + $0x80] sm:$0xff] %v584
        %617 = vst [vmem:[%s215 + $0x88] sm:$0xff] %v585
        %618 = vst [vmem:[%s215 + $0x90] sm:$0xff] %v586
        %619 = vst [vmem:[%s215 + $0x98] sm:$0xff] %v587
        %620 = vst [vmem:[%s215 + $0xa0] sm:$0xff] %v588
        %621 = vst [vmem:[%s215 + $0xa8] sm:$0xff] %v589
        %622 = vst [vmem:[%s215 + $0xb0] sm:$0xff] %v590
        %623 = vst [vmem:[%s215 + $0xb8] sm:$0xff] %v591
        %624 = vst [vmem:[%s215 + $0xc0] sm:$0xff] %v592
        %625 = vst [vmem:[%s215 + $0xc8] sm:$0xff] %v593
        %626 = vst [vmem:[%s215 + $0xd0] sm:$0xff] %v594
        %627 = vst [vmem:[%s215 + $0xd8] sm:$0xff] %v595
        %628 = vst [vmem:[%s215 + $0xe0] sm:$0xff] %v596
        %629 = vst [vmem:[%s215 + $0xe8] sm:$0xff] %v597
        %630 = vst [vmem:[%s215 + $0xf0] sm:$0xff] %v598
        %631 = vst [vmem:[%s215 + $0xf8] sm:$0xff] %v599
        // Predicated region
        $region41: #{tpu_custom_call.1} parent=27 // pred_check
          %p632 = pneg %p219
        $region42: #{tpu_custom_call.1} parent=27 // pred_check_branch
          %634 = sbr.rel (%p632) target = $region44
        $region43: #{tpu_custom_call.1} parent=27 // pred_region
          %v635 = vld [vmem:[%s215] sm:$0xff]
          %v636 = vld [vmem:[%s215 + $0x8] sm:$0xff]
          %v637 = vld [vmem:[%s215 + $0x10] sm:$0xff]
          %v638 = vld [vmem:[%s215 + $0x18] sm:$0xff]
          %v639 = vld [vmem:[%s215 + $0x20] sm:$0xff]
          %v640 = vld [vmem:[%s215 + $0x28] sm:$0xff]
          %v641 = vld [vmem:[%s215 + $0x30] sm:$0xff]
          %v642 = vld [vmem:[%s215 + $0x38] sm:$0xff]
          %v643 = vld [vmem:[%s215 + $0x40] sm:$0xff]
          %v644 = vld [vmem:[%s215 + $0x48] sm:$0xff]
          %v645 = vld [vmem:[%s215 + $0x50] sm:$0xff]
          %v646 = vld [vmem:[%s215 + $0x58] sm:$0xff]
          %v647 = vld [vmem:[%s215 + $0x60] sm:$0xff]
          %v648 = vld [vmem:[%s215 + $0x68] sm:$0xff]
          %v649 = vld [vmem:[%s215 + $0x70] sm:$0xff]
          %v650 = vld [vmem:[%s215 + $0x78] sm:$0xff]
          %v651 = vld [vmem:[%s215 + $0x80] sm:$0xff]
          %v652 = vld [vmem:[%s215 + $0x88] sm:$0xff]
          %v653 = vld [vmem:[%s215 + $0x90] sm:$0xff]
          %v654 = vld [vmem:[%s215 + $0x98] sm:$0xff]
          %v655 = vld [vmem:[%s215 + $0xa0] sm:$0xff]
          %v656 = vld [vmem:[%s215 + $0xa8] sm:$0xff]
          %v657 = vld [vmem:[%s215 + $0xb0] sm:$0xff]
          %v658 = vld [vmem:[%s215 + $0xb8] sm:$0xff]
          %v659 = vld [vmem:[%s215 + $0xc0] sm:$0xff]
          %v660 = vld [vmem:[%s215 + $0xc8] sm:$0xff]
          %v661 = vld [vmem:[%s215 + $0xd0] sm:$0xff]
          %v662 = vld [vmem:[%s215 + $0xd8] sm:$0xff]
          %v663 = vld [vmem:[%s215 + $0xe0] sm:$0xff]
          %v664 = vld [vmem:[%s215 + $0xe8] sm:$0xff]
          %v665 = vld [vmem:[%s215 + $0xf0] sm:$0xff]
          %v666 = vld [vmem:[%s215 + $0xf8] sm:$0xff]
          %v667 = vmul.f32 %v635, 0.2
          %v668 = vmul.f32 %v636, 0.2
          %v669 = vmul.f32 %v637, 0.2
          %v670 = vmul.f32 %v638, 0.2
          %v671 = vmul.f32 %v639, 0.2
          %v672 = vmul.f32 %v640, 0.2
          %v673 = vmul.f32 %v641, 0.2
          %v674 = vmul.f32 %v642, 0.2
          %v675 = vmul.f32 %v643, 0.2
          %v676 = vmul.f32 %v644, 0.2
          %v677 = vmul.f32 %v645, 0.2
          %v678 = vmul.f32 %v646, 0.2
          %v679 = vmul.f32 %v647, 0.2
          %v680 = vmul.f32 %v648, 0.2
          %v681 = vmul.f32 %v649, 0.2
          %v682 = vmul.f32 %v650, 0.2
          %v683 = vmul.f32 %v651, 0.2
          %v684 = vmul.f32 %v652, 0.2
          %v685 = vmul.f32 %v653, 0.2
          %v686 = vmul.f32 %v654, 0.2
          %v687 = vmul.f32 %v655, 0.2
          %v688 = vmul.f32 %v656, 0.2
          %v689 = vmul.f32 %v657, 0.2
          %v690 = vmul.f32 %v658, 0.2
          %v691 = vmul.f32 %v659, 0.2
          %v692 = vmul.f32 %v660, 0.2
          %v693 = vmul.f32 %v661, 0.2
          %v694 = vmul.f32 %v662, 0.2
          %v695 = vmul.f32 %v663, 0.2
          %v696 = vmul.f32 %v664, 0.2
          %v697 = vmul.f32 %v665, 0.2
          %v698 = vmul.f32 %v666, 0.2
          %v699 = vmax.f32 %v635, %v667
          %v700 = vmax.f32 %v636, %v668
          %v701 = vmax.f32 %v637, %v669
          %v702 = vmax.f32 %v638, %v670
          %v703 = vmax.f32 %v639, %v671
          %v704 = vmax.f32 %v640, %v672
          %v705 = vmax.f32 %v641, %v673
          %v706 = vmax.f32 %v642, %v674
          %v707 = vmax.f32 %v643, %v675
          %v708 = vmax.f32 %v644, %v676
          %v709 = vmax.f32 %v645, %v677
          %v710 = vmax.f32 %v646, %v678
          %v711 = vmax.f32 %v647, %v679
          %v712 = vmax.f32 %v648, %v680
          %v713 = vmax.f32 %v649, %v681
          %v714 = vmax.f32 %v650, %v682
          %v715 = vmax.f32 %v651, %v683
          %v716 = vmax.f32 %v652, %v684
          %v717 = vmax.f32 %v653, %v685
          %v718 = vmax.f32 %v654, %v686
          %v719 = vmax.f32 %v655, %v687
          %v720 = vmax.f32 %v656, %v688
          %v721 = vmax.f32 %v657, %v689
          %v722 = vmax.f32 %v658, %v690
          %v723 = vmax.f32 %v659, %v691
          %v724 = vmax.f32 %v660, %v692
          %v725 = vmax.f32 %v661, %v693
          %v726 = vmax.f32 %v662, %v694
          %v727 = vmax.f32 %v663, %v695
          %v728 = vmax.f32 %v664, %v696
          %v729 = vmax.f32 %v665, %v697
          %v730 = vmax.f32 %v666, %v698
          %731 = vst [vmem:[%s215] sm:$0xff] %v699
          %732 = vst [vmem:[%s215 + $0x8] sm:$0xff] %v700
          %733 = vst [vmem:[%s215 + $0x10] sm:$0xff] %v701
          %734 = vst [vmem:[%s215 + $0x18] sm:$0xff] %v702
          %735 = vst [vmem:[%s215 + $0x20] sm:$0xff] %v703
          %736 = vst [vmem:[%s215 + $0x28] sm:$0xff] %v704
          %737 = vst [vmem:[%s215 + $0x30] sm:$0xff] %v705
          %738 = vst [vmem:[%s215 + $0x38] sm:$0xff] %v706
          %739 = vst [vmem:[%s215 + $0x40] sm:$0xff] %v707
          %740 = vst [vmem:[%s215 + $0x48] sm:$0xff] %v708
          %741 = vst [vmem:[%s215 + $0x50] sm:$0xff] %v709
          %742 = vst [vmem:[%s215 + $0x58] sm:$0xff] %v710
          %743 = vst [vmem:[%s215 + $0x60] sm:$0xff] %v711
          %744 = vst [vmem:[%s215 + $0x68] sm:$0xff] %v712
          %745 = vst [vmem:[%s215 + $0x70] sm:$0xff] %v713
          %746 = vst [vmem:[%s215 + $0x78] sm:$0xff] %v714
          %747 = vst [vmem:[%s215 + $0x80] sm:$0xff] %v715
          %748 = vst [vmem:[%s215 + $0x88] sm:$0xff] %v716
          %749 = vst [vmem:[%s215 + $0x90] sm:$0xff] %v717
          %750 = vst [vmem:[%s215 + $0x98] sm:$0xff] %v718
          %751 = vst [vmem:[%s215 + $0xa0] sm:$0xff] %v719
          %752 = vst [vmem:[%s215 + $0xa8] sm:$0xff] %v720
          %753 = vst [vmem:[%s215 + $0xb0] sm:$0xff] %v721
          %754 = vst [vmem:[%s215 + $0xb8] sm:$0xff] %v722
          %755 = vst [vmem:[%s215 + $0xc0] sm:$0xff] %v723
          %756 = vst [vmem:[%s215 + $0xc8] sm:$0xff] %v724
          %757 = vst [vmem:[%s215 + $0xd0] sm:$0xff] %v725
          %758 = vst [vmem:[%s215 + $0xd8] sm:$0xff] %v726
          %759 = vst [vmem:[%s215 + $0xe0] sm:$0xff] %v727
          %760 = vst [vmem:[%s215 + $0xe8] sm:$0xff] %v728
          %761 = vst [vmem:[%s215 + $0xf0] sm:$0xff] %v729
          %762 = vst [vmem:[%s215 + $0xf8] sm:$0xff] %v730
        $region44: #{tpu_custom_call.1} parent=27 // pred_fallthru
          _
        %s763 = sand.u32 %s105, 1
        %s764 = scalar_lea.sflag [#allocation4], %s763
        %s765 = sand.u32 %s105, 1
        %s766 = smul.addr %s765, 256
        %s767 = scalar_lea.vmem [#allocation7], %s766
        // Predicated region
        $region45: #{tpu_custom_call.1} parent=27 // pred_check
          %p768 = pneg %p115
        $region46: #{tpu_custom_call.1} parent=27 // pred_check_branch
          %770 = sbr.rel (%p768) target = $region48
        $region47: #{tpu_custom_call.1} parent=27 // pred_region
          %s771 = smul.u32 32, %s25
          %773 = vsyncadd %s764, 0
          %s774 = sadd.s32 %s26, %s771
          %s775 = smul.addr %s774, 8
          %s776 = scalar_lea.hbm %s2, %s775
          %s777 = sshll.u32 %s767, 4
          %s778 = int_to_ptr.vmem [resolvable:$true] %s777
          %s779 = sshll.u32 %s776, 4
          %s780 = int_to_ptr.hbm [resolvable:$true] %s779
          %785 = dma.vmem_to_hbm [thread:$0]  %s778, 4096, %s780, %s764, 128, 128, 8
        $region48: #{tpu_custom_call.1} parent=27 // pred_fallthru
          _
      $region28: #{tpu_custom_call.1} parent=5 // pred_fallthru
        _
      %p786 = scmp.le.s32.totalorder 2, %s15
      // Predicated region
      $region49: #{tpu_custom_call.1} parent=5 // pred_check
        %p787 = pneg %p786
      $region50: #{tpu_custom_call.1} parent=5 // pred_check_branch
        %789 = sbr.rel (%p787) target = $region52
      $region51: #{tpu_custom_call.1} parent=5 // pred_region
        %s790 = ssub.s32 %s15, 2
        // Predicated region
        $region53: #{tpu_custom_call.1} parent=51 // pred_check
          %p791 = pneg %p121
        $region54: #{tpu_custom_call.1} parent=51 // pred_check_branch
          %793 = sbr.rel (%p791) target = $region56
        $region55: #{tpu_custom_call.1} parent=51 // pred_region
          %s794 = sand.u32 %s106, 1
          %s795 = scalar_lea.sflag [#allocation4], %s794
          %s796 = sand.u32 %s106, 1
          %s797 = smul.addr %s796, 256
          %s798 = scalar_lea.vmem [#allocation7], %s797
          %800 = dma.done %s795, 4096
        $region56: #{tpu_custom_call.1} parent=51 // pred_fallthru
          _
      $region52: #{tpu_custom_call.1} parent=5 // pred_fallthru
        _
    $region6: #{tpu_custom_call.1} parent=1 // loop_footer
      %s19 = sadd.s32 1, %s15
    $region7: #{tpu_custom_call.1} parent=1 // loop_footer_branch
      %14 = sbr.rel target = $region3
    $region8: #{tpu_custom_call.1} parent=1 // loop_exit
      _
    %801 = vsyncpa [#allocation3], 1
    %s802 = scalar_lea.sflag [#allocation3], 1
    %803 = vsyncpa %s802, 1
    %804 = vsyncpa [#allocation6], 1
    %805 = vsyncpa [#allocation4], 1
    %s806 = scalar_lea.sflag [#allocation4], 1
    %807 = vsyncpa %s806, 1

</llo_original>
